<compile_context>
chip_gen: v7x
topology: tpu7x:2x2x1
jax: 0.10.0
libtpu: 0.0.40
codegen_flags: <defaults>
</compile_context>

<pallas_src>
import jax
import jax.numpy as jnp
from jax.experimental import pallas as pl
from jax.experimental.pallas import tpu as pltpu

_LANE = 128
_MAX_TR = 256              # row-tile cap (rows map to the sublane axis)
_MAX_TL = 32768            # absolute lane-tile cap
_SMALL_L_PAD_MAX = 1024    # only pad the lane dim for genuinely small L
_MIN_SPLIT_BYTES = 128 * 1024  # only force a multi-block grid above this size


def _round_up(x, m):
    return ((x + m - 1) // m) * m


def _tile_budget_bytes():
    """Per-activation-tile byte budget, gated per TPU generation.

    v5e's scoped-VMEM default is 16 MiB, so keep tiles ~2 MiB there
    (in + out double-buffers = ~8 MiB).  v6e/v7x defaults are 32 MiB, so
    ~4 MiB tiles (~16 MiB working set) amortize the per-step overhead
    against their higher HBM bandwidth.
    """
    try:
        kind = jax.devices()[0].device_kind.lower()
    except Exception:
        kind = ""
    if "v5 lite" in kind or "v5e" in kind or "v5lite" in kind:
        return 2 << 20
    return 4 << 20


def _pick_tiles(R, L_work, itemsize, sublane):
    budget = _tile_budget_bytes()

    # Row tile: full extent (always a legal block dim) or a sublane multiple.
    if R <= _MAX_TR:
        tr = R
    else:
        tr = (_MAX_TR // sublane) * sublane

    # Lane tile: multiple of 128, fill the remaining byte budget.
    lane_cap = _round_up(L_work, _LANE)
    tl = (budget // max(tr * itemsize, 1)) // _LANE * _LANE
    tl = max(_LANE, min(tl, lane_cap, _MAX_TL))

    # Guarantee >=2 blocks along a parallel axis on medium+ shapes so both
    # v7x TensorCores get work (both grid axes are "parallel").
    total_bytes = R * L_work * itemsize
    single_block = ((R + tr - 1) // tr == 1) and ((L_work + tl - 1) // tl == 1)
    if single_block and total_bytes >= _MIN_SPLIT_BYTES:
        if R > sublane:
            tr = _round_up((R + 1) // 2, sublane)       # rows split first: keeps
        elif tl >= 2 * _LANE:                           # lane-dense stores wide
            tl = _round_up((L_work + 1) // 2, _LANE)
    return tr, tl


def _bn_affine_kernel(x_ref, p_ref, o_ref):
    # x_ref: (TR, TL) activations
    # p_ref: (TR, 2)  per-row params, [:, 0] = scale, [:, 1] = shift
    scale = p_ref[:, 0:1]
    shift = p_ref[:, 1:2]
    o_ref[...] = (x_ref[...] * scale + shift).astype(o_ref.dtype)


def batchnorm3d_eval(x, running_mean, running_var, weight, bias, eps=1e-5,
                     xla_fallback_max_elems=0):
    """Eval-mode BatchNorm3d. x: (N, C, D, H, W)."""
    N, C, D, H, W = x.shape

    # Fold BN into a per-channel affine (tiny glue, plain JAX).
    scale = (weight / jnp.sqrt(running_var + eps)).astype(jnp.float32)
    shift = (bias - running_mean * scale).astype(jnp.float32)

    # Tiny inputs are pure launch/DMA overhead: let XLA fuse the affine.
    # (Production would pass ~1<<20 here; the demo passes 0 to exercise Pallas.)
    if x.size <= xla_fallback_max_elems:
        return (x * scale[None, :, None, None, None]
                + shift[None, :, None, None, None]).astype(x.dtype)

    R = N * C
    L = D * H * W
    x2d = x.reshape(R, L)          # contiguous NCDHW -> pure bitcast, no copy

    itemsize = x.dtype.itemsize
    sublane = max(8, 8 * (4 // max(itemsize, 1)))   # 8 f32, 16 bf16, 32 int8

    # Only pad the lane axis when L is genuinely small: for big L, the pad and
    # final slice would each be an extra full HBM pass, so we instead let
    # Pallas mask just the ragged last lane tile.
    pad_lane = (L % _LANE != 0) and (L <= _SMALL_L_PAD_MAX)
    L_work = _round_up(L, _LANE) if pad_lane else L
    if pad_lane and L_work != L:
        x2d = jnp.pad(x2d, ((0, 0), (0, L_work - L)))

    # Per-row (scale, shift) packed into one (R, 2) array -> one tiny
    # side-channel block per row tile instead of two.
    params = jnp.stack([jnp.tile(scale, N), jnp.tile(shift, N)], axis=-1)

    tr, tl = _pick_tiles(R, L_work, itemsize, sublane)
    grid = (pl.cdiv(R, tr), pl.cdiv(L_work, tl))   # lane axis innermost

    out2d = pl.pallas_call(
        _bn_affine_kernel,
        out_shape=jax.ShapeDtypeStruct((R, L_work), x.dtype),
        grid_spec=pl.GridSpec(
            grid=grid,
            in_specs=[
                pl.BlockSpec((tr, tl), lambda i, j: (i, j)),
                pl.BlockSpec((tr, 2), lambda i, j: (i, 0)),
            ],
            out_specs=pl.BlockSpec((tr, tl), lambda i, j: (i, j)),
        ),
        compiler_params=pltpu.CompilerParams(
            dimension_semantics=("parallel", "parallel"),
            vmem_limit_bytes=32 << 20),
    )(x2d, params)

    if pad_lane and L_work != L:
        out2d = out2d[:, :L]
    return out2d.reshape(N, C, D, H, W)


if __name__ == "__main__":
    # Deterministic parameters from the PyTorch module's __init__.
    running_mean = jnp.array([0.5, 0.4, 0.3, 0.2, 0.4], dtype=jnp.float32)
    running_var = jnp.array([3.0, 2.0, 4.0, 2.0, 3.0], dtype=jnp.float32)
    weight = jnp.array([3.0, 2.0, 4.0, 2.0, 3.0], dtype=jnp.float32)
    bias = jnp.array([0.5, 0.4, 0.3, 0.2, 0.4], dtype=jnp.float32)

    key = jax.random.PRNGKey(0)
    x = jax.random.normal(key, (2, 5, 3, 6, 4), dtype=jnp.float32)

    bn = jax.jit(batchnorm3d_eval)
    out = jax.block_until_ready(bn(x, running_mean, running_var, weight, bias))

    # Pure-JAX reference check (eval-mode BN).
    eps = 1e-5
    ref = (x - running_mean[None, :, None, None, None]) / jnp.sqrt(
        running_var[None, :, None, None, None] + eps
    ) * weight[None, :, None, None, None] + bias[None, :, None, None, None]
    assert out.shape == (2, 5, 3, 6, 4)
    assert jnp.allclose(out, ref, atol=1e-5, rtol=1e-5)

    print("KERNEL_OK")
</pallas_src>

<mosaic_0001>
module attributes {stable_mosaic.version = 11 : i64} {
  func.func @_bn_affine_kernel(%arg0: i32, %arg1: i32, %arg2: memref<10x128xf32, #tpu.memory_space<vmem>>, %arg3: memref<10x2xf32, #tpu.memory_space<vmem>>, %arg4: memref<10x128xf32, #tpu.memory_space<vmem>>) attributes {dimension_semantics = [#tpu.dimension_semantics<parallel>, #tpu.dimension_semantics<parallel>], iteration_bounds = array<i64: 1, 1>, scalar_prefetch = 0 : i64, scratch_operands = 0 : i64, tpu.core_type = #tpu.core_type<tc>, window_params = [{transform_indices = @transform_0, window_bounds = array<i64: 10, 128>}, {transform_indices = @transform_1, window_bounds = array<i64: 10, 2>}, {transform_indices = @transform_2, window_bounds = array<i64: 10, 128>}]} {
    %c0 = arith.constant 0 : index
    %c0_0 = arith.constant 0 : index
    %0 = vector.load %arg3[%c0, %c0_0] : memref<10x2xf32, #tpu.memory_space<vmem>>, vector<10x1xf32>
    %c0_1 = arith.constant 0 : index
    %c1 = arith.constant 1 : index
    %1 = vector.load %arg3[%c0_1, %c1] : memref<10x2xf32, #tpu.memory_space<vmem>>, vector<10x1xf32>
    %c0_2 = arith.constant 0 : index
    %c0_3 = arith.constant 0 : index
    %2 = vector.load %arg2[%c0_2, %c0_3] : memref<10x128xf32, #tpu.memory_space<vmem>>, vector<10x128xf32>
    %3 = vector.broadcast %0 : vector<10x1xf32> to vector<10x128xf32>
    %4 = arith.mulf %2, %3 : vector<10x128xf32>
    %5 = vector.broadcast %1 : vector<10x1xf32> to vector<10x128xf32>
    %6 = arith.addf %4, %5 : vector<10x128xf32>
    %c0_4 = arith.constant 0 : index
    %c0_5 = arith.constant 0 : index
    %7 = vector.load %arg4[%c0_4, %c0_5] : memref<10x128xf32, #tpu.memory_space<vmem>>, vector<10x128xf32>
    tpu.vector_store %arg4[%c0_4, %c0_5], %6 {strides = array<i32>} : memref<10x128xf32, #tpu.memory_space<vmem>>, vector<10x128xf32>,
    return
  }
  func.func @transform_0(%arg0: i32, %arg1: i32) -> (i32, i32) {
    %c0_i32 = arith.constant 0 : i32
    return %arg0, %arg1 : i32, i32
  }
  func.func @transform_1(%arg0: i32, %arg1: i32) -> (i32, i32) {
    %c0_i32 = arith.constant 0 : i32
    %c0_i32_0 = arith.constant 0 : i32
    return %arg0, %c0_i32 : i32, i32
  }
  func.func @transform_2(%arg0: i32, %arg1: i32) -> (i32, i32) {
    %c0_i32 = arith.constant 0 : i32
    return %arg0, %arg1 : i32, i32
  }
}

</mosaic_0001>

<llo_original>
// kernel: tile.17
$region0: #{tile.17}
  #allocation0 [shape = 's32[1]{0}', space=sflag, size = 0x4, scoped, tag = 'scoped memory for tile.17']
  %s0 = inlined_call_operand.vmem [shape: f32[5], index: 0, kind: input, shape index: {}]
  %s1 = inlined_call_operand.vmem [shape: f32[2,5], index: 1, kind: output, shape index: {}]
  // Predicated region
  $region2: #{tile.17} parent=0 // pred_check
    _
  $region3: #{tile.17} parent=0 // pred_check_branch
    %3 = sbr.rel (0) target = $region5
  $region4: #{tile.17} parent=0 // pred_region
    _
  $region5: #{tile.17} parent=0 // pred_fallthru
    _
  %v4 = vld [vmem:[%s0] ss:$0 sm:$0xff]
  %5 = vst [vmem:[%s1] sm:$0x3] %v4

// kernel: tile.19
$region0: #{tile.19}
  %s0 = inlined_call_operand.vmem [shape: f32[2,5], index: 0, kind: input, shape index: {}]
  %s1 = inlined_call_operand.vmem [shape: f32[10,1], index: 1, kind: output, shape index: {}]
  $region1: #{tile.19} parent=0
    #allocation0 [shape = 'u8[4096]{0}', space=vmem, size = 0x1000, scoped, tag = 'scoped mem for output reshape']
    #allocation1 [shape = 'u8[4096]{0}', space=vmem, size = 0x1000, scoped, tag = 'scoped mem for input reshape']
    %s3 = sshllo.u32 0, 2
    %v4 = vld [vmem:[%s0] sm:%s3]
    %5 = vst [vmem:[#allocation1] sm:%s3] %v4
    %v6 = vld [vmem:[#allocation1] sm:$0x1]
    %vm7 = vcmask 39936
    %8 = vst.msk [vmem:[#allocation0] sm:$0x1] %vm7, %v6
    %s9 = scalar_lea.vmem [#allocation1], 1
    %v10 = vld [vmem:[%s9] sm:$0x1]
    %11 = vrot.lane.b32.xlu0 %v10, 5
    %v12 = vpop.permute.xlu0 %11
    %vm13 = vcmask 80936
    %14 = vst.msk [vmem:[#allocation0] sm:$0x1] %vm13, %v12
    %s16 = sshllo.u32 0, 1
    %v18 = vld [vmem:[#allocation0] sm:%s16]
    %s19 = sshllo.u32 0, 1
    %20 = vst [vmem:[%s1] sm:%s19] %v18

// kernel: batchnorm3d_eval.1
$region0: #{batchnorm3d_eval.1}
  #allocation0 [shape = 'u32[]', space=smem, size = 0x4, offset = 0x4, fixed_abs, tag = 'smem constant byte address 0x4 - core index']
  #allocation1 [shape = 'u32[144,128]{1,0:T(1,128)}', space=vmem, size = 0x12000, scoped, tag = 'internal scratch']
  %s0 = inlined_call_operand.vmem [shape: f32[10,128], index: 0, kind: input, shape index: {}]
  %s1 = inlined_call_operand.vmem [shape: f32[10,2], index: 1, kind: input, shape index: {}]
  %s2 = inlined_call_operand.vmem [shape: f32[10,128], index: 2, kind: output, shape index: {}]
  %s3 = sld [smem:[#allocation0]]
  $region18: #{batchnorm3d_eval.1} parent=0
    _
  %s5 = ssub.s32 1, %s3
  %s6 = scalar_select 0, %s5, %s3
  // Predicated region
  $region2: #{batchnorm3d_eval.1} parent=0 // pred_check
    _
  $region3: #{batchnorm3d_eval.1} parent=0 // pred_check_branch
    %8 = sbr.rel (0) target = $region5
  $region4: #{batchnorm3d_eval.1} parent=0 // pred_region
    _
  $region5: #{batchnorm3d_eval.1} parent=0 // pred_fallthru
    _
  // Predicated region
  $region6: #{batchnorm3d_eval.1} parent=0 // pred_check
    _
  $region7: #{batchnorm3d_eval.1} parent=0 // pred_check_branch
    %10 = sbr.rel (0) target = $region9
  $region8: #{batchnorm3d_eval.1} parent=0 // pred_region
    _
  $region9: #{batchnorm3d_eval.1} parent=0 // pred_fallthru
    _
  %v11 = vld [vmem:[%s1] sm:$0xff]
  %v12 = vld [vmem:[%s1 + $0x8] sm:$0x3]
  %v13 = vld [vmem:[%s0] sm:$0xff]
  %v14 = vld [vmem:[%s0 + $0x8] sm:$0x3]
  %16 = vset.pattern.permute.xlu0 0
  %17 = vperm.xlu0 %16, %v11
  %v18 = vpop.permute.xlu0 %17
  %21 = vset.pattern.permute.xlu0 0
  %22 = vperm.xlu0 %21, %v12
  %v23 = vpop.permute.xlu0 %22
  %v25 = vmul.f32 %v13, %v18
  %v26 = vmul.f32 %v14, %v23
  %27 = vset.pattern.permute.xlu0 1
  %28 = vperm.xlu0 %27, %v11
  %v29 = vpop.permute.xlu0 %28
  %31 = vset.pattern.permute.xlu0 1
  %32 = vperm.xlu0 %31, %v12
  %v33 = vpop.permute.xlu0 %32
  %v35 = vadd.f32 %v25, %v29
  %v36 = vadd.f32 %v26, %v33
  %37 = vst [vmem:[%s2] sm:$0xff] %v35
  %38 = vst [vmem:[%s2 + $0x8] sm:$0x3] %v36
  // Predicated region
  $region10: #{batchnorm3d_eval.1} parent=0 // pred_check
    _
  $region11: #{batchnorm3d_eval.1} parent=0 // pred_check_branch
    %40 = sbr.rel (0) target = $region13
  $region12: #{batchnorm3d_eval.1} parent=0 // pred_region
    _
  $region13: #{batchnorm3d_eval.1} parent=0 // pred_fallthru
    _
  // Predicated region
  $region14: #{batchnorm3d_eval.1} parent=0 // pred_check
    _
  $region15: #{batchnorm3d_eval.1} parent=0 // pred_check_branch
    %42 = sbr.rel (0) target = $region17
  $region16: #{batchnorm3d_eval.1} parent=0 // pred_region
    _
  $region17: #{batchnorm3d_eval.1} parent=0 // pred_fallthru
    _

</llo_original>
